<compile_context>
chip_gen: v7x
topology: tpu7x:2x2x1
jax: 0.10.0
libtpu: 0.0.40
codegen_flags: <defaults>
</compile_context>

<pallas_src>
import jax
import jax.numpy as jnp
import numpy as np
from jax.experimental import pallas as pl
from jax.experimental.pallas import tpu as pltpu


def _round_up(x, m):
    return (x + m - 1) // m * m


def _cdiv(a, b):
    return -(-a // b)


def _adaptive_pool_matrix(in_size, out_size):
    """Exact AdaptiveAvgPool1d weight matrix (PyTorch semantics), built host-side."""
    m = np.zeros((out_size, in_size), np.float32)
    for o in range(out_size):
        s = (o * in_size) // out_size
        e = _cdiv((o + 1) * in_size, out_size)
        m[o, s:e] = 1.0 / (e - s)
    return jnp.asarray(m)


def _caa_kernel(x_ref, w_ref, b_ref, out_ref):
    """Channel-major gate.  x_ref [Nb,C,HW] (native NCHW view), w_ref [Nb,C,1], b_ref [Nb,1,1]."""
    x = x_ref[...].astype(jnp.float32)                                      # [Nb, C, HW]
    # Per-position gate logits: per-channel weighted channel sum (sublane reduce, XLU slot).
    logits = jnp.sum(x * w_ref[...], axis=1, keepdims=True) + b_ref[...]    # [Nb, 1, HW]
    att = jax.nn.sigmoid(logits) + 1.0                                      # att*x + x == (att+1)*x
    out_ref[...] = (x * att).astype(out_ref.dtype)                          # sublane broadcast over C


def context_aware_attention(proposal_ftmp, item_idx, scene_ftmp, params, *,
                            pool_size, scale_ratio,
                            vmem_budget_bytes=20 * 1024 * 1024):
    """proposal_ftmp [N,C,H,W], item_idx [N] int, scene_ftmp [B,C,Hs,Ws] (NCHW)."""
    N, C, H, W = proposal_ftmp.shape
    B, Cs, Hs, Ws = scene_ftmp.shape
    assert Cs == C
    Cr = C // scale_ratio
    P = pool_size
    HW, PP = H * W, P * P

    # ---------------- tiny glue math (all on small tensors) ----------------
    # AdaptiveAvgPool2d(pool_size): exact for any spatial size via pooling matrices.
    mh = _adaptive_pool_matrix(Hs, P)
    mw = _adaptive_pool_matrix(Ws, P)
    pooled = jnp.einsum('ph,bchw,qw->bcpq', mh, scene_ftmp.astype(jnp.float32), mw)   # [B,C,P,P]
    scene_nl = jnp.transpose(pooled.reshape(B, C, PP), (0, 2, 1))                     # [B,PP,C]

    wp = params["proposal_conv_w"].reshape(Cr, C).T.astype(jnp.float32)   # [C, Cr]
    bp = params["proposal_conv_b"].reshape(Cr).astype(jnp.float32)        # [Cr]
    ws = params["scene_conv_w"].reshape(Cr, C).T.astype(jnp.float32)      # [C, Cr]
    bs = params["scene_conv_b"].reshape(Cr).astype(jnp.float32)           # [Cr]
    fcw = params["fc_w"].reshape(PP).astype(jnp.float32)                  # [PP]
    fcb = params["fc_b"].reshape(()).astype(jnp.float32)                  # scalar

    # Collapse the (linear) scene/fc branch to per-scene effective gate params:
    #   logits[n, p] = sum_c x[n, c, p] * w_eff[idx_n, c] + b_eff[idx_n]   (exact identity)
    s_red = jnp.einsum('bpc,cr->bpr', scene_nl, ws) + bs                  # [B, PP, Cr]
    v = jnp.einsum('bpr,p->br', s_red, fcw)                               # [B, Cr]
    w_eff = jnp.einsum('cr,br->bc', wp, v)                                # [B, C]
    b_eff = jnp.einsum('br,r->b', v, bp) + fcb                            # [B]

    # Per-proposal gather of the (tiny) gate params.
    # TODO(synk): out-of-range item_idx cannot raise under jit; indices are clipped to [0, B-1].
    idx = jnp.clip(item_idx.astype(jnp.int32), 0, B - 1)
    w_pp = w_eff[idx]                                                     # [N, C]
    b_pp = b_eff[idx]                                                     # [N]

    # ---------------- block sizing (VMEM estimate + grid shape) ----------------
    itemsize = jnp.dtype(proposal_ftmp.dtype).itemsize
    c_pad = _round_up(C, 8)
    hw_pad = _round_up(HW, 128)
    per_prop = ((2 + 2) * c_pad * hw_pad * itemsize   # double-buffered in/out proposal blocks
                + 3 * c_pad * hw_pad * 4              # in-kernel f32 temporaries (x, prod, out)
                + 2 * c_pad * 128 * 4                 # [Nb,C,1] weight buffers (lane-padded)
                + 2 * 8 * 128 * 4)                    # [Nb,1,1] bias buffers (lane-padded)
    nb = int(min(128, N, max(1, vmem_budget_bytes // per_prop)))
    if N >= 32 and _cdiv(N, nb) < 4:
        nb = _cdiv(N, 4)            # keep >=4 grid steps: dual-TC sharding + DMA/compute overlap
    nb_div = next(d for d in range(nb, 0, -1) if N % d == 0)
    if 2 * nb_div >= nb:            # prefer an exact divisor: no padding copy of the big tensor
        nb, n_pad = nb_div, N
        x_view = proposal_ftmp.reshape(N, C, HW)      # pure row-major view of NCHW, no copy
    else:                           # fallback: pad the proposal axis (one extra HBM copy)
        n_pad = _cdiv(N, nb) * nb
        x_view = jnp.pad(proposal_ftmp.reshape(N, C, HW), ((0, n_pad - N), (0, 0), (0, 0)))
    if n_pad != N:
        w_pp = jnp.pad(w_pp, ((0, n_pad - N), (0, 0)))
        b_pp = jnp.pad(b_pp, (0, n_pad - N))
    w3 = w_pp.reshape(n_pad, C, 1)   # delivered with C on sublanes -> no in-kernel relayout
    b3 = b_pp.reshape(n_pad, 1, 1)

    grid_spec = pltpu.PrefetchScalarGridSpec(
        num_scalar_prefetch=0,
        grid=(n_pad // nb,),
        in_specs=[
            pl.BlockSpec((nb, C, HW), lambda n: (n, 0, 0)),   # native NCHW proposal block
            pl.BlockSpec((nb, C, 1), lambda n: (n, 0, 0)),    # per-proposal gate weights
            pl.BlockSpec((nb, 1, 1), lambda n: (n, 0, 0)),    # per-proposal gate bias
        ],
        out_specs=pl.BlockSpec((nb, C, HW), lambda n: (n, 0, 0)),
    )

    out = pl.pallas_call(
        _caa_kernel,
        grid_spec=grid_spec,
        out_shape=jax.ShapeDtypeStruct((n_pad, C, HW), proposal_ftmp.dtype),
        compiler_params=pltpu.CompilerParams(
            dimension_semantics=("parallel",),
            vmem_limit_bytes=48 * 1024 * 1024,
        ),
    )(x_view, w3, b3)

    return out[:N].reshape(N, C, H, W)


def reference(proposal_ftmp, item_idx, scene_ftmp, params, *, pool_size, scale_ratio):
    """Plain-JAX mirror of the PyTorch forward (per-proposal form of the group loop)."""
    N, C, H, W = proposal_ftmp.shape
    B, _, Hs, Ws = scene_ftmp.shape
    Cr = C // scale_ratio
    P = pool_size
    pooled = scene_ftmp.reshape(B, C, P, Hs // P, P, Ws // P).mean(axis=(3, 5))
    scene_red = (jnp.einsum('bchw,oc->bohw', pooled, params["scene_conv_w"].reshape(Cr, C))
                 + params["scene_conv_b"][None, :, None, None])
    prop_red = (jnp.einsum('nchw,oc->nohw', proposal_ftmp,
                           params["proposal_conv_w"].reshape(Cr, C))
                + params["proposal_conv_b"][None, :, None, None])
    scene_flat = scene_red.reshape(B, Cr, P * P)[item_idx]                    # [N, Cr, PP]
    r_item = jnp.transpose(prop_red.reshape(N, Cr, H * W), (0, 2, 1))         # [N, HW, Cr]
    att = jnp.einsum('nxc,ncp->nxp', r_item, scene_flat)                      # [N, HW, PP]
    logits = att @ params["fc_w"].reshape(1, P * P).T + params["fc_b"]        # [N, HW, 1]
    a = jax.nn.sigmoid(logits).reshape(N, H, W)[:, None, :, :]
    return a * proposal_ftmp + proposal_ftmp


if __name__ == "__main__":
    # Small config consistent with the module: in_channel=32, scale_ratio=8 -> Cr=4,
    # pool_size=4, proposals N=6 of 8x8, scenes B=2 of 8x8.
    C, scale_ratio, P = 32, 8, 4
    N, H, W = 6, 8, 8
    B, Hs, Ws = 2, 8, 8
    Cr = C // scale_ratio

    key = jax.random.PRNGKey(0)
    ks = jax.random.split(key, 8)
    proposal_ftmp = jax.random.normal(ks[0], (N, C, H, W), jnp.float32)
    scene_ftmp = jax.random.normal(ks[1], (B, C, Hs, Ws), jnp.float32)
    item_idx = jnp.array([0, 0, 1, 1, 0, 1], dtype=jnp.int32)

    params = {
        "scene_conv_w": 0.1 * jax.random.normal(ks[2], (Cr, C, 1, 1), jnp.float32),
        "scene_conv_b": 0.1 * jax.random.normal(ks[3], (Cr,), jnp.float32),
        "proposal_conv_w": 0.1 * jax.random.normal(ks[4], (Cr, C, 1, 1), jnp.float32),
        "proposal_conv_b": 0.1 * jax.random.normal(ks[5], (Cr,), jnp.float32),
        "fc_w": 0.1 * jax.random.normal(ks[6], (1, P * P), jnp.float32),
        "fc_b": 0.1 * jax.random.normal(ks[7], (1,), jnp.float32),
    }

    out = context_aware_attention(proposal_ftmp, item_idx, scene_ftmp, params,
                                  pool_size=P, scale_ratio=scale_ratio)
    out = jax.block_until_ready(out)

    ref = jax.block_until_ready(reference(proposal_ftmp, item_idx, scene_ftmp, params,
                                          pool_size=P, scale_ratio=scale_ratio))
    if not np.allclose(np.asarray(out), np.asarray(ref), rtol=1e-4, atol=1e-4):
        raise AssertionError("Pallas kernel output mismatch vs reference")

    print("KERNEL_OK")
</pallas_src>

<mosaic_0001>
module attributes {stable_mosaic.version = 11 : i64} {
  func.func @_caa_kernel(%arg0: i32, %arg1: memref<6x32x64xf32, #tpu.memory_space<vmem>>, %arg2: memref<6x32x1xf32, #tpu.memory_space<vmem>>, %arg3: memref<6x1x1xf32, #tpu.memory_space<vmem>>, %arg4: memref<6x32x64xf32, #tpu.memory_space<vmem>>) attributes {dimension_semantics = [#tpu.dimension_semantics<parallel>], iteration_bounds = array<i64: 1>, scalar_prefetch = 0 : i64, scratch_operands = 0 : i64, tpu.core_type = #tpu.core_type<tc>, window_params = [{transform_indices = @transform_0, window_bounds = array<i64: 6, 32, 64>}, {transform_indices = @transform_1, window_bounds = array<i64: 6, 32, 1>}, {transform_indices = @transform_2, window_bounds = array<i64: 6, 1, 1>}, {transform_indices = @transform_3, window_bounds = array<i64: 6, 32, 64>}]} {
    %c0 = arith.constant 0 : index
    %c0_0 = arith.constant 0 : index
    %c0_1 = arith.constant 0 : index
    %0 = vector.load %arg1[%c0, %c0_0, %c0_1] : memref<6x32x64xf32, #tpu.memory_space<vmem>>, vector<6x32x64xf32>
    %c0_2 = arith.constant 0 : index
    %c0_3 = arith.constant 0 : index
    %c0_4 = arith.constant 0 : index
    %1 = vector.load %arg2[%c0_2, %c0_3, %c0_4] : memref<6x32x1xf32, #tpu.memory_space<vmem>>, vector<6x32x1xf32>
    %2 = vector.broadcast %1 : vector<6x32x1xf32> to vector<6x32x64xf32>
    %3 = arith.mulf %0, %2 : vector<6x32x64xf32>
    %cst = arith.constant dense<0.000000e+00> : vector<6x64xf32>
    %4 = vector.multi_reduction <add>, %3, %cst [1] : vector<6x32x64xf32> to vector<6x64xf32>
    %5 = vector.shape_cast %4 : vector<6x64xf32> to vector<6x1x64xf32>
    %c0_5 = arith.constant 0 : index
    %c0_6 = arith.constant 0 : index
    %c0_7 = arith.constant 0 : index
    %6 = vector.load %arg3[%c0_5, %c0_6, %c0_7] : memref<6x1x1xf32, #tpu.memory_space<vmem>>, vector<6x1x1xf32>
    %7 = vector.broadcast %6 : vector<6x1x1xf32> to vector<6x1x64xf32>
    %8 = arith.addf %5, %7 : vector<6x1x64xf32>
    %9 = arith.negf %8 : vector<6x1x64xf32>
    %10 = math.exp %9 : vector<6x1x64xf32>
    %cst_8 = arith.constant 1.000000e+00 : f32
    %11 = vector.broadcast %cst_8 : f32 to vector<6x1x64xf32>
    %12 = arith.addf %11, %10 : vector<6x1x64xf32>
    %13 = arith.divf %11, %12 : vector<6x1x64xf32>
    %cst_9 = arith.constant 1.000000e+00 : f32
    %14 = vector.broadcast %cst_9 : f32 to vector<6x1x64xf32>
    %15 = arith.addf %13, %14 : vector<6x1x64xf32>
    %16 = vector.broadcast %15 : vector<6x1x64xf32> to vector<6x32x64xf32>
    %17 = arith.mulf %0, %16 : vector<6x32x64xf32>
    %c0_10 = arith.constant 0 : index
    %c0_11 = arith.constant 0 : index
    %c0_12 = arith.constant 0 : index
    %18 = vector.load %arg4[%c0_10, %c0_11, %c0_12] : memref<6x32x64xf32, #tpu.memory_space<vmem>>, vector<6x32x64xf32>
    tpu.vector_store %arg4[%c0_10, %c0_11, %c0_12], %17 {strides = array<i32>} : memref<6x32x64xf32, #tpu.memory_space<vmem>>, vector<6x32x64xf32>,
    return
  }
  func.func @transform_0(%arg0: i32) -> (i32, i32, i32) {
    %c0_i32 = arith.constant 0 : i32
    %c0_i32_0 = arith.constant 0 : i32
    %c0_i32_1 = arith.constant 0 : i32
    return %arg0, %c0_i32, %c0_i32_0 : i32, i32, i32
  }
  func.func @transform_1(%arg0: i32) -> (i32, i32, i32) {
    %c0_i32 = arith.constant 0 : i32
    %c0_i32_0 = arith.constant 0 : i32
    %c0_i32_1 = arith.constant 0 : i32
    return %arg0, %c0_i32, %c0_i32_0 : i32, i32, i32
  }
  func.func @transform_2(%arg0: i32) -> (i32, i32, i32) {
    %c0_i32 = arith.constant 0 : i32
    %c0_i32_0 = arith.constant 0 : i32
    %c0_i32_1 = arith.constant 0 : i32
    return %arg0, %c0_i32, %c0_i32_0 : i32, i32, i32
  }
  func.func @transform_3(%arg0: i32) -> (i32, i32, i32) {
    %c0_i32 = arith.constant 0 : i32
    %c0_i32_0 = arith.constant 0 : i32
    %c0_i32_1 = arith.constant 0 : i32
    return %arg0, %c0_i32, %c0_i32_0 : i32, i32, i32
  }
}

</mosaic_0001>

<llo_original>
// kernel: tpu_custom_call.1
$region0: #{tpu_custom_call.1}
  #allocation0 [shape = 'u32[]', space=smem, size = 0x4, offset = 0x4, fixed_abs, tag = 'smem constant byte address 0x4 - core index']
  #allocation1 [shape = 'u32[144,128]{1,0:T(1,128)}', space=vmem, size = 0x12000, scoped, tag = 'internal scratch']
  %s0 = inlined_call_operand.vmem [shape: f32[6,32,64], index: 0, kind: input, shape index: {}]
  %s1 = inlined_call_operand.vmem [shape: f32[6,32,1], index: 1, kind: input, shape index: {}]
  %s2 = inlined_call_operand.vmem [shape: f32[6,1,1], index: 2, kind: input, shape index: {}]
  %s3 = inlined_call_operand.hbm [shape: f32[6,32,64], index: 3, kind: output, shape index: {}]
  %s4 = sld [smem:[#allocation0]]
  $region22: #{tpu_custom_call.1} parent=0
    _
  %s6 = ssub.s32 1, %s4
  %s7 = scalar_select 0, %s6, %s4
  $region1: #{tpu_custom_call.1} parent=0
    #allocation2 [shape = 'u8[98304]{0}', space=vmem, size = 0x18000, scoped, tag = 'output window, operand 0, single buffered']
    #allocation3 [shape = 's32[1]{0}', space=sflag, size = 0x4, scoped, tag = 'scoped memory for tpu_custom_call.1']
    %8 = vsyncpa [#allocation3], 0
    // Predicated region
    $region2: #{tpu_custom_call.1} parent=1 // pred_check
      _
    $region3: #{tpu_custom_call.1} parent=1 // pred_check_branch
      %10 = sbr.rel (0) target = $region5
    $region4: #{tpu_custom_call.1} parent=1 // pred_region
      _
    $region5: #{tpu_custom_call.1} parent=1 // pred_fallthru
      _
    // Predicated region
    $region6: #{tpu_custom_call.1} parent=1 // pred_check
      _
    $region7: #{tpu_custom_call.1} parent=1 // pred_check_branch
      %12 = sbr.rel (0) target = $region9
    $region8: #{tpu_custom_call.1} parent=1 // pred_region
      _
    $region9: #{tpu_custom_call.1} parent=1 // pred_fallthru
      _
    // Predicated region
    $region10: #{tpu_custom_call.1} parent=1 // pred_check
      _
    $region11: #{tpu_custom_call.1} parent=1 // pred_check_branch
      %14 = sbr.rel (0) target = $region13
    $region12: #{tpu_custom_call.1} parent=1 // pred_region
      _
    $region13: #{tpu_custom_call.1} parent=1 // pred_fallthru
      _
    %v15 = vld [vmem:[%s0] sm:$0xff]
    %v16 = vld [vmem:[%s0 + $0x8] sm:$0xff]
    %v17 = vld [vmem:[%s0 + $0x10] sm:$0xff]
    %v18 = vld [vmem:[%s0 + $0x18] sm:$0xff]
    %v19 = vld [vmem:[%s0 + $0x20] sm:$0xff]
    %v20 = vld [vmem:[%s0 + $0x28] sm:$0xff]
    %v21 = vld [vmem:[%s0 + $0x30] sm:$0xff]
    %v22 = vld [vmem:[%s0 + $0x38] sm:$0xff]
    %v23 = vld [vmem:[%s0 + $0x40] sm:$0xff]
    %v24 = vld [vmem:[%s0 + $0x48] sm:$0xff]
    %v25 = vld [vmem:[%s0 + $0x50] sm:$0xff]
    %v26 = vld [vmem:[%s0 + $0x58] sm:$0xff]
    %v27 = vld [vmem:[%s0 + $0x60] sm:$0xff]
    %v28 = vld [vmem:[%s0 + $0x68] sm:$0xff]
    %v29 = vld [vmem:[%s0 + $0x70] sm:$0xff]
    %v30 = vld [vmem:[%s0 + $0x78] sm:$0xff]
    %v31 = vld [vmem:[%s0 + $0x80] sm:$0xff]
    %v32 = vld [vmem:[%s0 + $0x88] sm:$0xff]
    %v33 = vld [vmem:[%s0 + $0x90] sm:$0xff]
    %v34 = vld [vmem:[%s0 + $0x98] sm:$0xff]
    %v35 = vld [vmem:[%s0 + $0xa0] sm:$0xff]
    %v36 = vld [vmem:[%s0 + $0xa8] sm:$0xff]
    %v37 = vld [vmem:[%s0 + $0xb0] sm:$0xff]
    %v38 = vld [vmem:[%s0 + $0xb8] sm:$0xff]
    %v39 = vld [vmem:[%s1] sm:$0xff]
    %v40 = vld [vmem:[%s1 + $0x8] sm:$0xff]
    %v41 = vld [vmem:[%s1 + $0x10] sm:$0xff]
    %v42 = vld [vmem:[%s1 + $0x18] sm:$0xff]
    %v43 = vld [vmem:[%s1 + $0x20] sm:$0xff]
    %v44 = vld [vmem:[%s1 + $0x28] sm:$0xff]
    %v45 = vld [vmem:[%s1 + $0x30] sm:$0xff]
    %v46 = vld [vmem:[%s1 + $0x38] sm:$0xff]
    %v47 = vld [vmem:[%s1 + $0x40] sm:$0xff]
    %v48 = vld [vmem:[%s1 + $0x48] sm:$0xff]
    %v49 = vld [vmem:[%s1 + $0x50] sm:$0xff]
    %v50 = vld [vmem:[%s1 + $0x58] sm:$0xff]
    %v51 = vld [vmem:[%s1 + $0x60] sm:$0xff]
    %v52 = vld [vmem:[%s1 + $0x68] sm:$0xff]
    %v53 = vld [vmem:[%s1 + $0x70] sm:$0xff]
    %v54 = vld [vmem:[%s1 + $0x78] sm:$0xff]
    %v55 = vld [vmem:[%s1 + $0x80] sm:$0xff]
    %v56 = vld [vmem:[%s1 + $0x88] sm:$0xff]
    %v57 = vld [vmem:[%s1 + $0x90] sm:$0xff]
    %v58 = vld [vmem:[%s1 + $0x98] sm:$0xff]
    %v59 = vld [vmem:[%s1 + $0xa0] sm:$0xff]
    %v60 = vld [vmem:[%s1 + $0xa8] sm:$0xff]
    %v61 = vld [vmem:[%s1 + $0xb0] sm:$0xff]
    %v62 = vld [vmem:[%s1 + $0xb8] sm:$0xff]
    %64 = vset.pattern.permute.xlu0 0
    %65 = vperm.xlu0 %64, %v39
    %v66 = vpop.permute.xlu0 %65
    %69 = vset.pattern.permute.xlu0 0
    %70 = vperm.xlu0 %69, %v40
    %v71 = vpop.permute.xlu0 %70
    %74 = vset.pattern.permute.xlu0 0
    %75 = vperm.xlu0 %74, %v41
    %v76 = vpop.permute.xlu0 %75
    %79 = vset.pattern.permute.xlu0 0
    %80 = vperm.xlu0 %79, %v42
    %v81 = vpop.permute.xlu0 %80
    %84 = vset.pattern.permute.xlu0 0
    %85 = vperm.xlu0 %84, %v43
    %v86 = vpop.permute.xlu0 %85
    %89 = vset.pattern.permute.xlu0 0
    %90 = vperm.xlu0 %89, %v44
    %v91 = vpop.permute.xlu0 %90
    %94 = vset.pattern.permute.xlu0 0
    %95 = vperm.xlu0 %94, %v45
    %v96 = vpop.permute.xlu0 %95
    %99 = vset.pattern.permute.xlu0 0
    %100 = vperm.xlu0 %99, %v46
    %v101 = vpop.permute.xlu0 %100
    %104 = vset.pattern.permute.xlu0 0
    %105 = vperm.xlu0 %104, %v47
    %v106 = vpop.permute.xlu0 %105
    %109 = vset.pattern.permute.xlu0 0
    %110 = vperm.xlu0 %109, %v48
    %v111 = vpop.permute.xlu0 %110
    %114 = vset.pattern.permute.xlu0 0
    %115 = vperm.xlu0 %114, %v49
    %v116 = vpop.permute.xlu0 %115
    %119 = vset.pattern.permute.xlu0 0
    %120 = vperm.xlu0 %119, %v50
    %v121 = vpop.permute.xlu0 %120
    %124 = vset.pattern.permute.xlu0 0
    %125 = vperm.xlu0 %124, %v51
    %v126 = vpop.permute.xlu0 %125
    %129 = vset.pattern.permute.xlu0 0
    %130 = vperm.xlu0 %129, %v52
    %v131 = vpop.permute.xlu0 %130
    %134 = vset.pattern.permute.xlu0 0
    %135 = vperm.xlu0 %134, %v53
    %v136 = vpop.permute.xlu0 %135
    %139 = vset.pattern.permute.xlu0 0
    %140 = vperm.xlu0 %139, %v54
    %v141 = vpop.permute.xlu0 %140
    %144 = vset.pattern.permute.xlu0 0
    %145 = vperm.xlu0 %144, %v55
    %v146 = vpop.permute.xlu0 %145
    %149 = vset.pattern.permute.xlu0 0
    %150 = vperm.xlu0 %149, %v56
    %v151 = vpop.permute.xlu0 %150
    %154 = vset.pattern.permute.xlu0 0
    %155 = vperm.xlu0 %154, %v57
    %v156 = vpop.permute.xlu0 %155
    %159 = vset.pattern.permute.xlu0 0
    %160 = vperm.xlu0 %159, %v58
    %v161 = vpop.permute.xlu0 %160
    %164 = vset.pattern.permute.xlu0 0
    %165 = vperm.xlu0 %164, %v59
    %v166 = vpop.permute.xlu0 %165
    %169 = vset.pattern.permute.xlu0 0
    %170 = vperm.xlu0 %169, %v60
    %v171 = vpop.permute.xlu0 %170
    %174 = vset.pattern.permute.xlu0 0
    %175 = vperm.xlu0 %174, %v61
    %v176 = vpop.permute.xlu0 %175
    %179 = vset.pattern.permute.xlu0 0
    %180 = vperm.xlu0 %179, %v62
    %v181 = vpop.permute.xlu0 %180
    %v183 = vmul.f32 %v15, %v66
    %v184 = vmul.f32 %v16, %v71
    %v185 = vmul.f32 %v17, %v76
    %v186 = vmul.f32 %v18, %v81
    %v187 = vmul.f32 %v19, %v86
    %v188 = vmul.f32 %v20, %v91
    %v189 = vmul.f32 %v21, %v96
    %v190 = vmul.f32 %v22, %v101
    %v191 = vmul.f32 %v23, %v106
    %v192 = vmul.f32 %v24, %v111
    %v193 = vmul.f32 %v25, %v116
    %v194 = vmul.f32 %v26, %v121
    %v195 = vmul.f32 %v27, %v126
    %v196 = vmul.f32 %v28, %v131
    %v197 = vmul.f32 %v29, %v136
    %v198 = vmul.f32 %v30, %v141
    %v199 = vmul.f32 %v31, %v146
    %v200 = vmul.f32 %v32, %v151
    %v201 = vmul.f32 %v33, %v156
    %v202 = vmul.f32 %v34, %v161
    %v203 = vmul.f32 %v35, %v166
    %v204 = vmul.f32 %v36, %v171
    %v205 = vmul.f32 %v37, %v176
    %v206 = vmul.f32 %v38, %v181
    %vm207 = vcmask 523264
    %v208 = vsel %vm207, %v183, 0.0
    %v209 = vsel %vm207, %v184, 0.0
    %v210 = vadd.f32 %v208, %v209
    %v211 = vsel %vm207, %v185, 0.0
    %v212 = vadd.f32 %v210, %v211
    %v213 = vsel %vm207, %v186, 0.0
    %v214 = vadd.f32 %v212, %v213
    %v215 = vrot.slane %v214, 4
    %v216 = vadd.f32 %v214, %v215
    %v217 = vrot.slane %v216, 2
    %v218 = vadd.f32 %v216, %v217
    %v219 = vrot.slane %v218, 1
    %v220 = vadd.f32 %v218, %v219
    %v221 = vsel %vm207, %v187, 0.0
    %v222 = vsel %vm207, %v188, 0.0
    %v223 = vadd.f32 %v221, %v222
    %v224 = vsel %vm207, %v189, 0.0
    %v225 = vadd.f32 %v223, %v224
    %v226 = vsel %vm207, %v190, 0.0
    %v227 = vadd.f32 %v225, %v226
    %v228 = vrot.slane %v227, 4
    %v229 = vadd.f32 %v227, %v228
    %v230 = vrot.slane %v229, 2
    %v231 = vadd.f32 %v229, %v230
    %v232 = vrot.slane %v231, 1
    %v233 = vadd.f32 %v231, %v232
    %v234 = vsel %vm207, %v191, 0.0
    %v235 = vsel %vm207, %v192, 0.0
    %v236 = vadd.f32 %v234, %v235
    %v237 = vsel %vm207, %v193, 0.0
    %v238 = vadd.f32 %v236, %v237
    %v239 = vsel %vm207, %v194, 0.0
    %v240 = vadd.f32 %v238, %v239
    %v241 = vrot.slane %v240, 4
    %v242 = vadd.f32 %v240, %v241
    %v243 = vrot.slane %v242, 2
    %v244 = vadd.f32 %v242, %v243
    %v245 = vrot.slane %v244, 1
    %v246 = vadd.f32 %v244, %v245
    %v247 = vsel %vm207, %v195, 0.0
    %v248 = vsel %vm207, %v196, 0.0
    %v249 = vadd.f32 %v247, %v248
    %v250 = vsel %vm207, %v197, 0.0
    %v251 = vadd.f32 %v249, %v250
    %v252 = vsel %vm207, %v198, 0.0
    %v253 = vadd.f32 %v251, %v252
    %v254 = vrot.slane %v253, 4
    %v255 = vadd.f32 %v253, %v254
    %v256 = vrot.slane %v255, 2
    %v257 = vadd.f32 %v255, %v256
    %v258 = vrot.slane %v257, 1
    %v259 = vadd.f32 %v257, %v258
    %v260 = vsel %vm207, %v199, 0.0
    %v261 = vsel %vm207, %v200, 0.0
    %v262 = vadd.f32 %v260, %v261
    %v263 = vsel %vm207, %v201, 0.0
    %v264 = vadd.f32 %v262, %v263
    %v265 = vsel %vm207, %v202, 0.0
    %v266 = vadd.f32 %v264, %v265
    %v267 = vrot.slane %v266, 4
    %v268 = vadd.f32 %v266, %v267
    %v269 = vrot.slane %v268, 2
    %v270 = vadd.f32 %v268, %v269
    %v271 = vrot.slane %v270, 1
    %v272 = vadd.f32 %v270, %v271
    %v273 = vsel %vm207, %v203, 0.0
    %v274 = vsel %vm207, %v204, 0.0
    %v275 = vadd.f32 %v273, %v274
    %v276 = vsel %vm207, %v205, 0.0
    %v277 = vadd.f32 %v275, %v276
    %v278 = vsel %vm207, %v206, 0.0
    %v279 = vadd.f32 %v277, %v278
    %v280 = vrot.slane %v279, 4
    %v281 = vadd.f32 %v279, %v280
    %v282 = vrot.slane %v281, 2
    %v283 = vadd.f32 %v281, %v282
    %v284 = vrot.slane %v283, 1
    %v285 = vadd.f32 %v283, %v284
    %v286 = vld [vmem:[%s2] sm:$0x1]
    %v287 = vld [vmem:[%s2 + $0x1] sm:$0x1]
    %v288 = vld [vmem:[%s2 + $0x2] sm:$0x1]
    %v289 = vld [vmem:[%s2 + $0x3] sm:$0x1]
    %v290 = vld [vmem:[%s2 + $0x4] sm:$0x1]
    %v291 = vld [vmem:[%s2 + $0x5] sm:$0x1]
    %293 = vset.pattern.permute.xlu0 0
    %294 = vperm.xlu0 %293, %v286
    %v295 = vpop.permute.xlu0 %294
    %v297 = vlaneseq
    %v298 = vshrl.u32 %v297, 7
    %v299 = vsub.s32 0, %v298
    %v300 = vrot.slane %v295, %v299
    %302 = vset.pattern.permute.xlu0 0
    %303 = vperm.xlu0 %302, %v287
    %v304 = vpop.permute.xlu0 %303
    %v306 = vlaneseq
    %v307 = vshrl.u32 %v306, 7
    %v308 = vsub.s32 0, %v307
    %v309 = vrot.slane %v304, %v308
    %311 = vset.pattern.permute.xlu0 0
    %312 = vperm.xlu0 %311, %v288
    %v313 = vpop.permute.xlu0 %312
    %v315 = vlaneseq
    %v316 = vshrl.u32 %v315, 7
    %v317 = vsub.s32 0, %v316
    %v318 = vrot.slane %v313, %v317
    %320 = vset.pattern.permute.xlu0 0
    %321 = vperm.xlu0 %320, %v289
    %v322 = vpop.permute.xlu0 %321
    %v324 = vlaneseq
    %v325 = vshrl.u32 %v324, 7
    %v326 = vsub.s32 0, %v325
    %v327 = vrot.slane %v322, %v326
    %329 = vset.pattern.permute.xlu0 0
    %330 = vperm.xlu0 %329, %v290
    %v331 = vpop.permute.xlu0 %330
    %v333 = vlaneseq
    %v334 = vshrl.u32 %v333, 7
    %v335 = vsub.s32 0, %v334
    %v336 = vrot.slane %v331, %v335
    %338 = vset.pattern.permute.xlu0 0
    %339 = vperm.xlu0 %338, %v291
    %v340 = vpop.permute.xlu0 %339
    %v342 = vlaneseq
    %v343 = vshrl.u32 %v342, 7
    %v344 = vsub.s32 0, %v343
    %v345 = vrot.slane %v340, %v344
    %v346 = vadd.f32 %v220, %v300
    %v347 = vadd.f32 %v233, %v309
    %v348 = vadd.f32 %v246, %v318
    %v349 = vadd.f32 %v259, %v327
    %v350 = vadd.f32 %v272, %v336
    %v351 = vadd.f32 %v285, %v345
    %v352 = vxor.u32 %v346, 2147483648
    %v353 = vxor.u32 %v347, 2147483648
    %v354 = vxor.u32 %v348, 2147483648
    %v355 = vxor.u32 %v349, 2147483648
    %v356 = vxor.u32 %v350, 2147483648
    %v357 = vxor.u32 %v351, 2147483648
    %v358 = vmul.f32 %v352, 1.442695
    %v359 = vpow.pop %v358
    %v360 = vmul.f32 %v353, 1.442695
    %v361 = vpow.pop %v360
    %v362 = vmul.f32 %v354, 1.442695
    %v363 = vpow.pop %v362
    %v364 = vmul.f32 %v355, 1.442695
    %v365 = vpow.pop %v364
    %v366 = vmul.f32 %v356, 1.442695
    %v367 = vpow.pop %v366
    %v368 = vmul.f32 %v357, 1.442695
    %v369 = vpow.pop %v368
    %v370 = vadd.f32 %v359, 1.0
    %v371 = vadd.f32 %v361, 1.0
    %v372 = vadd.f32 %v363, 1.0
    %v373 = vadd.f32 %v365, 1.0
    %v374 = vadd.f32 %v367, 1.0
    %v375 = vadd.f32 %v369, 1.0
    %v376 = vrcp.pop %v370
    %v377 = vmul.f32 1.0, %v376
    %v378 = vrcp.pop %v371
    %v379 = vmul.f32 1.0, %v378
    %v380 = vrcp.pop %v372
    %v381 = vmul.f32 1.0, %v380
    %v382 = vrcp.pop %v373
    %v383 = vmul.f32 1.0, %v382
    %v384 = vrcp.pop %v374
    %v385 = vmul.f32 1.0, %v384
    %v386 = vrcp.pop %v375
    %v387 = vmul.f32 1.0, %v386
    %v388 = vadd.f32 %v377, 1.0
    %v389 = vadd.f32 %v379, 1.0
    %v390 = vadd.f32 %v381, 1.0
    %v391 = vadd.f32 %v383, 1.0
    %v392 = vadd.f32 %v385, 1.0
    %v393 = vadd.f32 %v387, 1.0
    %v394 = vmul.f32 %v15, %v388
    %v395 = vmul.f32 %v16, %v388
    %v396 = vmul.f32 %v17, %v388
    %v397 = vmul.f32 %v18, %v388
    %v398 = vmul.f32 %v19, %v389
    %v399 = vmul.f32 %v20, %v389
    %v400 = vmul.f32 %v21, %v389
    %v401 = vmul.f32 %v22, %v389
    %v402 = vmul.f32 %v23, %v390
    %v403 = vmul.f32 %v24, %v390
    %v404 = vmul.f32 %v25, %v390
    %v405 = vmul.f32 %v26, %v390
    %v406 = vmul.f32 %v27, %v391
    %v407 = vmul.f32 %v28, %v391
    %v408 = vmul.f32 %v29, %v391
    %v409 = vmul.f32 %v30, %v391
    %v410 = vmul.f32 %v31, %v392
    %v411 = vmul.f32 %v32, %v392
    %v412 = vmul.f32 %v33, %v392
    %v413 = vmul.f32 %v34, %v392
    %v414 = vmul.f32 %v35, %v393
    %v415 = vmul.f32 %v36, %v393
    %v416 = vmul.f32 %v37, %v393
    %v417 = vmul.f32 %v38, %v393
    %418 = vst.msk [vmem:[#allocation2] sm:$0xff] %vm207, %v394
    %419 = vst.msk [vmem:[#allocation2 + $0x8] sm:$0xff] %vm207, %v395
    %420 = vst.msk [vmem:[#allocation2 + $0x10] sm:$0xff] %vm207, %v396
    %421 = vst.msk [vmem:[#allocation2 + $0x18] sm:$0xff] %vm207, %v397
    %422 = vst.msk [vmem:[#allocation2 + $0x20] sm:$0xff] %vm207, %v398
    %423 = vst.msk [vmem:[#allocation2 + $0x28] sm:$0xff] %vm207, %v399
    %424 = vst.msk [vmem:[#allocation2 + $0x30] sm:$0xff] %vm207, %v400
    %425 = vst.msk [vmem:[#allocation2 + $0x38] sm:$0xff] %vm207, %v401
    %426 = vst.msk [vmem:[#allocation2 + $0x40] sm:$0xff] %vm207, %v402
    %427 = vst.msk [vmem:[#allocation2 + $0x48] sm:$0xff] %vm207, %v403
    %428 = vst.msk [vmem:[#allocation2 + $0x50] sm:$0xff] %vm207, %v404
    %429 = vst.msk [vmem:[#allocation2 + $0x58] sm:$0xff] %vm207, %v405
    %430 = vst.msk [vmem:[#allocation2 + $0x60] sm:$0xff] %vm207, %v406
    %431 = vst.msk [vmem:[#allocation2 + $0x68] sm:$0xff] %vm207, %v407
    %432 = vst.msk [vmem:[#allocation2 + $0x70] sm:$0xff] %vm207, %v408
    %433 = vst.msk [vmem:[#allocation2 + $0x78] sm:$0xff] %vm207, %v409
    %434 = vst.msk [vmem:[#allocation2 + $0x80] sm:$0xff] %vm207, %v410
    %435 = vst.msk [vmem:[#allocation2 + $0x88] sm:$0xff] %vm207, %v411
    %436 = vst.msk [vmem:[#allocation2 + $0x90] sm:$0xff] %vm207, %v412
    %437 = vst.msk [vmem:[#allocation2 + $0x98] sm:$0xff] %vm207, %v413
    %438 = vst.msk [vmem:[#allocation2 + $0xa0] sm:$0xff] %vm207, %v414
    %439 = vst.msk [vmem:[#allocation2 + $0xa8] sm:$0xff] %vm207, %v415
    %440 = vst.msk [vmem:[#allocation2 + $0xb0] sm:$0xff] %vm207, %v416
    %441 = vst.msk [vmem:[#allocation2 + $0xb8] sm:$0xff] %vm207, %v417
    // Predicated region
    $region14: #{tpu_custom_call.1} parent=1 // pred_check
      _
    $region15: #{tpu_custom_call.1} parent=1 // pred_check_branch
      %443 = sbr.rel (0) target = $region17
    $region16: #{tpu_custom_call.1} parent=1 // pred_region
      %s445 = ssub.s32 3072, 3072
      %446 = vsyncadd [#allocation3], %s445
      %s447 = sshll.u32 [#allocation2], 4
      %s448 = int_to_ptr.vmem [resolvable:$true] %s447
      %453 = dma.vmem_to_hbm [thread:$0]  %s448, 3072, %s3, [#allocation3], 128, 128, 8
    $region17: #{tpu_custom_call.1} parent=1 // pred_fallthru
      _
    // Predicated region
    $region18: #{tpu_custom_call.1} parent=1 // pred_check
      _
    $region19: #{tpu_custom_call.1} parent=1 // pred_check_branch
      %455 = sbr.rel (0) target = $region21
    $region20: #{tpu_custom_call.1} parent=1 // pred_region
      %456 = dma.done [#allocation3], 3072
    $region21: #{tpu_custom_call.1} parent=1 // pred_fallthru
      _
    %457 = vsyncpa [#allocation3], 1

</llo_original>
